<compile_context>
chip_gen: v7x
topology: tpu7x:2x2x1
jax: 0.10.0
libtpu: 0.0.40
codegen_flags: <defaults>
</compile_context>

<pallas_src>
import jax
import jax.numpy as jnp
from jax import lax
from jax.experimental import pallas as pl
from jax.experimental.pallas import tpu as pltpu

_BN_EPS = 1e-5


def projector_kernel(x_ref, w1_ref, gamma_ref, beta_ref, w2_ref, b2_ref, o_ref):
    # ---- Linear 1 (MXU).  No bias: cancelled by training-mode BatchNorm. ----
    x = x_ref[...].astype(jnp.float32)
    h = jnp.dot(x, w1_ref[...], preferred_element_type=jnp.float32)   # (B, d1)

    # ---- BatchNorm1d (training mode: batch stats, biased variance), one pass ----
    inv_b = 1.0 / h.shape[0]
    s1 = jnp.sum(h, axis=0, keepdims=True)                 # (1, d1)
    s2 = jnp.sum(h * h, axis=0, keepdims=True)             # (1, d1)
    mean = s1 * inv_b
    var = jnp.maximum(s2 * inv_b - mean * mean, 0.0)       # biased variance
    scale = gamma_ref[...] * lax.rsqrt(var + _BN_EPS)      # EUP rsqrt
    shift = beta_ref[...] - mean * scale

    # ---- fused BN affine + ReLU (VPU) ----
    r = jnp.maximum(h * scale + shift, 0.0)

    # ---- Linear 2 (MXU), lane-dense padded output ----
    out = jnp.dot(r, w2_ref[...], preferred_element_type=jnp.float32) + b2_ref[...]
    o_ref[...] = out.astype(o_ref.dtype)


def projector_forward(x, w1, gamma, beta, w2, b2):
    """x:(B,d0), w1:(d0,d1), gamma/beta:(1,d1), w2:(d1,d2), b2:(1,d2) -> (B,d2)."""
    B = x.shape[0]
    d2 = w2.shape[1]
    # Lane-dense output: pad the output feature dim up to a multiple of 128 so the
    # store path uses full (unmasked) vector stores.
    d2_pad = ((d2 + 127) // 128) * 128
    pad = d2_pad - d2
    w2_p = jnp.pad(w2, ((0, 0), (0, pad))) if pad else w2
    b2_p = jnp.pad(b2, ((0, 0), (0, pad))) if pad else b2

    vmem = pltpu.MemorySpace.VMEM
    out_padded = pl.pallas_call(
        projector_kernel,
        out_shape=jax.ShapeDtypeStruct((B, d2_pad), jnp.float32),
        in_specs=[pl.BlockSpec(memory_space=vmem)] * 6,
        out_specs=pl.BlockSpec(memory_space=vmem),
    )(x, w1, gamma, beta, w2_p, b2_p)
    return out_padded[:, :d2]


def projector_reference(x, w1, b1, gamma, beta, w2, b2):
    # Full PyTorch-equivalent math, INCLUDING b1, to verify that dropping b1 in the
    # kernel is exact (modulo float rounding) under training-mode BatchNorm.
    h = x @ w1 + b1
    mean = jnp.mean(h, axis=0, keepdims=True)
    var = jnp.mean((h - mean) ** 2, axis=0, keepdims=True)
    h = (h - mean) / jnp.sqrt(var + _BN_EPS) * gamma + beta
    r = jnp.maximum(h, 0.0)
    return r @ w2 + b2


if __name__ == "__main__":
    # Projector(shape=(d0, d1, d2))
    d0, d1, d2 = 32, 64, 16
    B = 8

    key = jax.random.PRNGKey(0)
    kx, k1, k2, k3, k4 = jax.random.split(key, 5)

    x = jax.random.normal(kx, (B, d0), dtype=jnp.float32)

    # Deterministic synthetic parameters (shapes from nn.Linear / nn.BatchNorm1d;
    # linear weights stored transposed as (in, out)).
    w1 = jax.random.normal(k1, (d0, d1), dtype=jnp.float32) * (1.0 / jnp.sqrt(d0))
    b1 = jax.random.normal(k2, (1, d1), dtype=jnp.float32) * 0.1   # reference only
    gamma = jnp.ones((1, d1), dtype=jnp.float32)                   # BatchNorm1d weight
    beta = jnp.zeros((1, d1), dtype=jnp.float32)                   # BatchNorm1d bias
    w2 = jax.random.normal(k3, (d1, d2), dtype=jnp.float32) * (1.0 / jnp.sqrt(d1))
    b2 = jax.random.normal(k4, (1, d2), dtype=jnp.float32) * 0.1

    out = projector_forward(x, w1, gamma, beta, w2, b2)
    out = jax.block_until_ready(out)

    ref = projector_reference(x, w1, b1, gamma, beta, w2, b2)
    assert out.shape == (B, d2)
    assert jnp.allclose(out, ref, atol=1e-4, rtol=1e-4), "mismatch vs reference"

    print("KERNEL_OK")
</pallas_src>

<mosaic_0001>
module attributes {stable_mosaic.version = 11 : i64} {
  func.func @projector_kernel(%arg0: memref<8x32xf32, #tpu.memory_space<vmem>>, %arg1: memref<32x64xf32, #tpu.memory_space<vmem>>, %arg2: memref<1x64xf32, #tpu.memory_space<vmem>>, %arg3: memref<1x64xf32, #tpu.memory_space<vmem>>, %arg4: memref<64x128xf32, #tpu.memory_space<vmem>>, %arg5: memref<1x128xf32, #tpu.memory_space<vmem>>, %arg6: memref<8x128xf32, #tpu.memory_space<vmem>>) attributes {dimension_semantics = [], scalar_prefetch = 0 : i64, scratch_operands = 0 : i64, tpu.core_type = #tpu.core_type<tc>} {
    %c0 = arith.constant 0 : index
    %c0_0 = arith.constant 0 : index
    %0 = vector.load %arg0[%c0, %c0_0] : memref<8x32xf32, #tpu.memory_space<vmem>>, vector<8x32xf32>
    %c0_1 = arith.constant 0 : index
    %c0_2 = arith.constant 0 : index
    %1 = vector.load %arg1[%c0_1, %c0_2] : memref<32x64xf32, #tpu.memory_space<vmem>>, vector<32x64xf32>
    %cst = arith.constant dense<0.000000e+00> : vector<8x64xf32>
    %2 = tpu.matmul %0, %1, %cst {dimension_numbers = #tpu.dot_dimension_numbers<[1], [0], [0], [1], [0, 0, 1, 1], [], []>} : vector<8x32xf32>, vector<32x64xf32>, vector<8x64xf32> -> vector<8x64xf32>
    %cst_3 = arith.constant dense<0.000000e+00> : vector<64xf32>
    %3 = vector.multi_reduction <add>, %2, %cst_3 [0] : vector<8x64xf32> to vector<64xf32>
    %4 = vector.shape_cast %3 : vector<64xf32> to vector<1x64xf32>
    %5 = arith.mulf %2, %2 : vector<8x64xf32>
    %cst_4 = arith.constant dense<0.000000e+00> : vector<64xf32>
    %6 = vector.multi_reduction <add>, %5, %cst_4 [0] : vector<8x64xf32> to vector<64xf32>
    %7 = vector.shape_cast %6 : vector<64xf32> to vector<1x64xf32>
    %cst_5 = arith.constant 1.250000e-01 : f32
    %8 = vector.broadcast %cst_5 : f32 to vector<1x64xf32>
    %9 = arith.mulf %4, %8 : vector<1x64xf32>
    %cst_6 = arith.constant 1.250000e-01 : f32
    %10 = vector.broadcast %cst_6 : f32 to vector<1x64xf32>
    %11 = arith.mulf %7, %10 : vector<1x64xf32>
    %12 = arith.mulf %9, %9 : vector<1x64xf32>
    %13 = arith.subf %11, %12 : vector<1x64xf32>
    %cst_7 = arith.constant 0.000000e+00 : f32
    %14 = vector.broadcast %cst_7 : f32 to vector<1x64xf32>
    %15 = arith.maximumf %13, %14 : vector<1x64xf32>
    %c0_8 = arith.constant 0 : index
    %c0_9 = arith.constant 0 : index
    %16 = vector.load %arg2[%c0_8, %c0_9] : memref<1x64xf32, #tpu.memory_space<vmem>>, vector<1x64xf32>
    %cst_10 = arith.constant 9.99999974E-6 : f32
    %17 = vector.broadcast %cst_10 : f32 to vector<1x64xf32>
    %18 = arith.addf %15, %17 : vector<1x64xf32>
    %19 = math.rsqrt %18 : vector<1x64xf32>
    %20 = arith.mulf %16, %19 : vector<1x64xf32>
    %c0_11 = arith.constant 0 : index
    %c0_12 = arith.constant 0 : index
    %21 = vector.load %arg3[%c0_11, %c0_12] : memref<1x64xf32, #tpu.memory_space<vmem>>, vector<1x64xf32>
    %22 = arith.mulf %9, %20 : vector<1x64xf32>
    %23 = arith.subf %21, %22 : vector<1x64xf32>
    %24 = vector.broadcast %20 : vector<1x64xf32> to vector<8x64xf32>
    %25 = arith.mulf %2, %24 : vector<8x64xf32>
    %26 = vector.broadcast %23 : vector<1x64xf32> to vector<8x64xf32>
    %27 = arith.addf %25, %26 : vector<8x64xf32>
    %cst_13 = arith.constant 0.000000e+00 : f32
    %28 = vector.broadcast %cst_13 : f32 to vector<8x64xf32>
    %29 = arith.maximumf %27, %28 : vector<8x64xf32>
    %c0_14 = arith.constant 0 : index
    %c0_15 = arith.constant 0 : index
    %30 = vector.load %arg4[%c0_14, %c0_15] : memref<64x128xf32, #tpu.memory_space<vmem>>, vector<64x128xf32>
    %cst_16 = arith.constant dense<0.000000e+00> : vector<8x128xf32>
    %31 = tpu.matmul %29, %30, %cst_16 {dimension_numbers = #tpu.dot_dimension_numbers<[1], [0], [0], [1], [0, 0, 1, 1], [], []>} : vector<8x64xf32>, vector<64x128xf32>, vector<8x128xf32> -> vector<8x128xf32>
    %c0_17 = arith.constant 0 : index
    %c0_18 = arith.constant 0 : index
    %32 = vector.load %arg5[%c0_17, %c0_18] : memref<1x128xf32, #tpu.memory_space<vmem>>, vector<1x128xf32>
    %33 = vector.broadcast %32 : vector<1x128xf32> to vector<8x128xf32>
    %34 = arith.addf %31, %33 : vector<8x128xf32>
    %c0_19 = arith.constant 0 : index
    %c0_20 = arith.constant 0 : index
    %35 = vector.load %arg6[%c0_19, %c0_20] : memref<8x128xf32, #tpu.memory_space<vmem>>, vector<8x128xf32>
    tpu.vector_store %arg6[%c0_19, %c0_20], %34 {strides = array<i32>} : memref<8x128xf32, #tpu.memory_space<vmem>>, vector<8x128xf32>,
    return
  }
}

</mosaic_0001>

<llo_original>
// kernel: tpu_custom_call.1
$region0: #{tpu_custom_call.1}
  #allocation0 [shape = 'u32[]', space=smem, size = 0x4, offset = 0x4, fixed_abs, tag = 'smem constant byte address 0x4 - core index']
  #allocation1 [shape = 'u32[144,128]{1,0:T(1,128)}', space=vmem, size = 0x12000, scoped, tag = 'internal scratch']
  %s0 = inlined_call_operand.hbm [shape: f32[8,32], index: 0, kind: input, shape index: {}]
  %s1 = inlined_call_operand.hbm [shape: f32[32,64], index: 1, kind: input, shape index: {}]
  %s2 = inlined_call_operand.vmem [shape: f32[1,64], index: 2, kind: input, shape index: {}]
  %s3 = inlined_call_operand.vmem [shape: f32[1,64], index: 3, kind: input, shape index: {}]
  %s4 = inlined_call_operand.hbm [shape: f32[64,128], index: 4, kind: input, shape index: {}]
  %s5 = inlined_call_operand.vmem [shape: f32[1,128], index: 5, kind: input, shape index: {}]
  %s6 = inlined_call_operand.hbm [shape: f32[8,128], index: 6, kind: output, shape index: {}]
  %s7 = sld [smem:[#allocation0]]
  $region46: #{tpu_custom_call.1} parent=0
    _
  %s9 = ssub.s32 1, %s7
  %s10 = scalar_select 0, %s9, %s7
  $region1: #{tpu_custom_call.1} parent=0
    #allocation2 [shape = 'u8[4096]{0}', space=vmem, size = 0x1000, scoped, tag = 'input window, operand 0, single buffered']
    #allocation3 [shape = 's32[1]{0}', space=sflag, size = 0x4, scoped, tag = 'scoped memory for tpu_custom_call.1']
    #allocation4 [shape = 's32[1]{0}', space=sflag, size = 0x4, scoped, tag = 'scoped memory for tpu_custom_call.1']
    #allocation5 [shape = 'u8[16384]{0}', space=vmem, size = 0x4000, scoped, tag = 'input window, operand 1, single buffered']
    #allocation6 [shape = 's32[1]{0}', space=sflag, size = 0x4, scoped, tag = 'scoped memory for tpu_custom_call.1']
    #allocation7 [shape = 'u8[32768]{0}', space=vmem, size = 0x8000, scoped, tag = 'input window, operand 4, single buffered']
    #allocation8 [shape = 'u8[4096]{0}', space=vmem, size = 0x1000, scoped, tag = 'output window, operand 0, single buffered']
    %11 = vsyncpa [#allocation3], 0
    %12 = vsyncpa [#allocation6], 0
    %13 = vsyncpa [#allocation4], 0
    // Predicated region
    $region2: #{tpu_custom_call.1} parent=1 // pred_check
      _
    $region3: #{tpu_custom_call.1} parent=1 // pred_check_branch
      %15 = sbr.rel (0) target = $region5
    $region4: #{tpu_custom_call.1} parent=1 // pred_region
      %s17 = ssub.s32 128, 128
      %18 = vsyncadd [#allocation3], %s17
      %s20 = sshll.u32 [#allocation2], 4
      %s21 = int_to_ptr.vmem [resolvable:$true] %s20
      %23 = dma.hbm_to_vmem [thread:$0]  %s0, 128, %s21, [#allocation3]
    $region5: #{tpu_custom_call.1} parent=1 // pred_fallthru
      _
    // Predicated region
    $region6: #{tpu_custom_call.1} parent=1 // pred_check
      _
    $region7: #{tpu_custom_call.1} parent=1 // pred_check_branch
      %25 = sbr.rel (0) target = $region9
    $region8: #{tpu_custom_call.1} parent=1 // pred_region
      %s27 = ssub.s32 512, 512
      %28 = vsyncadd [#allocation6], %s27
      %s29 = sshll.u32 [#allocation5], 4
      %s30 = int_to_ptr.vmem [resolvable:$true] %s29
      %35 = dma.hbm_to_vmem [thread:$0]  %s1, 512, %s30, [#allocation6], 128, 128, 8
    $region9: #{tpu_custom_call.1} parent=1 // pred_fallthru
      _
    // Predicated region
    $region10: #{tpu_custom_call.1} parent=1 // pred_check
      _
    $region11: #{tpu_custom_call.1} parent=1 // pred_check_branch
      %37 = sbr.rel (0) target = $region13
    $region12: #{tpu_custom_call.1} parent=1 // pred_region
      _
    $region13: #{tpu_custom_call.1} parent=1 // pred_fallthru
      _
    // Predicated region
    $region14: #{tpu_custom_call.1} parent=1 // pred_check
      _
    $region15: #{tpu_custom_call.1} parent=1 // pred_check_branch
      %39 = sbr.rel (0) target = $region17
    $region16: #{tpu_custom_call.1} parent=1 // pred_region
      _
    $region17: #{tpu_custom_call.1} parent=1 // pred_fallthru
      _
    // Predicated region
    $region18: #{tpu_custom_call.1} parent=1 // pred_check
      _
    $region19: #{tpu_custom_call.1} parent=1 // pred_check_branch
      %41 = sbr.rel (0) target = $region21
    $region20: #{tpu_custom_call.1} parent=1 // pred_region
      %s43 = ssub.s32 1024, 1024
      %44 = vsyncadd [#allocation6], %s43
      %s45 = sshll.u32 [#allocation7], 4
      %s46 = int_to_ptr.vmem [resolvable:$true] %s45
      %51 = dma.hbm_to_vmem [thread:$0]  %s4, 1024, %s46, [#allocation6], 128, 128, 8
    $region21: #{tpu_custom_call.1} parent=1 // pred_fallthru
      _
    // Predicated region
    $region22: #{tpu_custom_call.1} parent=1 // pred_check
      _
    $region23: #{tpu_custom_call.1} parent=1 // pred_check_branch
      %53 = sbr.rel (0) target = $region25
    $region24: #{tpu_custom_call.1} parent=1 // pred_region
      _
    $region25: #{tpu_custom_call.1} parent=1 // pred_fallthru
      _
    // Predicated region
    $region26: #{tpu_custom_call.1} parent=1 // pred_check
      _
    $region27: #{tpu_custom_call.1} parent=1 // pred_check_branch
      %55 = sbr.rel (0) target = $region29
    $region28: #{tpu_custom_call.1} parent=1 // pred_region
      %56 = dma.done [#allocation3], 128
    $region29: #{tpu_custom_call.1} parent=1 // pred_fallthru
      _
    // Predicated region
    $region30: #{tpu_custom_call.1} parent=1 // pred_check
      _
    $region31: #{tpu_custom_call.1} parent=1 // pred_check_branch
      %58 = sbr.rel (0) target = $region33
    $region32: #{tpu_custom_call.1} parent=1 // pred_region
      %59 = dma.done [#allocation6], 512
    $region33: #{tpu_custom_call.1} parent=1 // pred_fallthru
      _
    // Predicated region
    $region34: #{tpu_custom_call.1} parent=1 // pred_check
      _
    $region35: #{tpu_custom_call.1} parent=1 // pred_check_branch
      %61 = sbr.rel (0) target = $region37
    $region36: #{tpu_custom_call.1} parent=1 // pred_region
      %62 = dma.done [#allocation6], 1024
    $region37: #{tpu_custom_call.1} parent=1 // pred_fallthru
      _
    %v63 = vld [vmem:[#allocation2] sm:$0xff]
    %v64 = vld [vmem:[#allocation5] sm:$0xff]
    %v65 = vld [vmem:[#allocation5 + $0x8] sm:$0xff]
    %v66 = vld [vmem:[#allocation5 + $0x10] sm:$0xff]
    %v67 = vld [vmem:[#allocation5 + $0x18] sm:$0xff]
    %vm68 = vcmask 261120
    %v70 = vsel %vm68, %v63, 0
    %72 = vmatprep.subr.mxu0 0.0
    %73 = vmatpush1.msra.mxu0 %v64
    %74 = vmatprep.subr.mxu0 0.0
    %75 = vmatpush1.msra.mxu0 %v65
    %76 = vmatprep.subr.mxu0 0.0
    %77 = vmatpush1.msra.mxu0 %v66
    %78 = vmatprep.subr.mxu0 0.0
    %79 = vmatpush1.msra.mxu0 %v67
    %80 = vmatprep.subr.mxu0 0.0
    %81 = vmatpush1.msra.mxu0 0.0
    %82 = vmatprep.subr.mxu0 0.0
    %83 = vmatpush1.msra.mxu0 0.0
    %84 = vmatprep.subr.mxu0 0.0
    %85 = vmatpush1.msra.mxu0 0.0
    %86 = vmatprep.subr.mxu0 0.0
    %87 = vmatpush1.msra.mxu0 0.0
    %88 = vmatprep.subr.mxu0 0.0
    %89 = vmatpush1.msra.mxu0 0.0
    %90 = vmatprep.subr.mxu0 0.0
    %91 = vmatpush1.msra.mxu0 0.0
    %92 = vmatprep.subr.mxu0 0.0
    %93 = vmatpush1.msra.mxu0 0.0
    %94 = vmatprep.subr.mxu0 0.0
    %95 = vmatpush1.msra.mxu0 0.0
    %96 = vmatprep.subr.mxu0 0.0
    %97 = vmatpush1.msra.mxu0 0.0
    %98 = vmatprep.subr.mxu0 0.0
    %99 = vmatpush1.msra.mxu0 0.0
    %100 = vmatprep.subr.mxu0 0.0
    %101 = vmatpush1.msra.mxu0 0.0
    %102 = vmatprep.subr.mxu0 0.0
    %103 = vmatpush1.msra.mxu0 0.0
    %104 = vmatprep.subr.mxu0 0.0
    %105 = vmatpush1.msra.mxu0 0.0
    %106 = vmatprep.subr.mxu0 0.0
    %107 = vmatpush1.msra.mxu0 0.0
    %108 = vmatprep.subr.mxu0 0.0
    %109 = vmatpush1.msra.mxu0 0.0
    %110 = vmatprep.subr.mxu0 0.0
    %111 = vmatpush1.msra.mxu0 0.0
    %112 = vmatprep.subr.mxu0 0.0
    %113 = vmatpush1.msra.mxu0 0.0
    %114 = vmatprep.subr.mxu0 0.0
    %115 = vmatpush1.msra.mxu0 0.0
    %116 = vmatprep.subr.mxu0 0.0
    %117 = vmatpush1.msra.mxu0 0.0
    %118 = vmatprep.subr.mxu0 0.0
    %119 = vmatpush1.msra.mxu0 0.0
    %120 = vmatprep.subr.mxu0 0.0
    %121 = vmatpush1.msra.mxu0 0.0
    %122 = vmatprep.subr.mxu0 0.0
    %123 = vmatpush1.msra.mxu0 0.0
    %124 = vmatprep.subr.mxu0 0.0
    %125 = vmatpush1.msra.mxu0 0.0
    %126 = vmatprep.subr.mxu0 0.0
    %127 = vmatpush1.msra.mxu0 0.0
    %128 = vmatprep.subr.mxu0 0.0
    %129 = vmatpush1.msra.mxu0 0.0
    %130 = vmatprep.subr.mxu0 0.0
    %131 = vmatpush1.msra.mxu0 0.0
    %132 = vmatprep.subr.mxu0 0.0
    %133 = vmatpush1.msra.mxu0 0.0
    %134 = vmatprep.subr.mxu0 0.0
    %135 = vmatpush1.msra.mxu0 0.0
    %136 = vmatprep.mubr.f32.mxu0 0.0
    %137 = vmatmul.mubr.f32.gmra.mrb[0].mxu0 %v70
    %v138 = vpop.f32.mrb[0].mxu0
    %v139 = vadd.f32 0.0, %v138
    %v140 = vpop.f32.mrb[0].mxu0
    %141 = vdwg.mxu0
    %vm142 = vcmask 523264
    %v143 = vsel %vm142, %v139, 0.0
    %v144 = vrot.slane %v143, 4
    %v145 = vadd.f32 %v143, %v144
    %v146 = vrot.slane %v145, 2
    %v147 = vadd.f32 %v145, %v146
    %v148 = vrot.slane %v147, 1
    %v149 = vadd.f32 %v147, %v148
    %v150 = vmul.f32 %v139, %v139
    %v151 = vsel %vm142, %v150, 0.0
    %v152 = vrot.slane %v151, 4
    %v153 = vadd.f32 %v151, %v152
    %v154 = vrot.slane %v153, 2
    %v155 = vadd.f32 %v153, %v154
    %v156 = vrot.slane %v155, 1
    %v157 = vadd.f32 %v155, %v156
    %v158 = vmul.f32 %v149, 0.125
    %v159 = vmul.f32 %v157, 0.125
    %v160 = vmul.f32 %v158, %v158
    %v161 = vsub.f32 %v159, %v160
    %v162 = vmax.f32 %v161, 0.0
    %v163 = vld [vmem:[%s2] sm:$0x1]
    %v164 = vadd.f32 %v162, 1e-05
    %v165 = vrsqrt.pop %v164
    %v166 = vmul.f32 %v163, %v165
    %v167 = vld [vmem:[%s3] sm:$0x1]
    %v168 = vmul.f32 %v158, %v166
    %v169 = vsub.f32 %v167, %v168
    %v171 = vlaneseq
    %v172 = vshrl.u32 %v171, 7
    %v173 = vsub.s32 0, %v172
    %v174 = vrot.slane %v166, %v173
    %v176 = vmul.f32 %v139, %v174
    %v178 = vlaneseq
    %v179 = vshrl.u32 %v178, 7
    %v180 = vsub.s32 0, %v179
    %v181 = vrot.slane %v169, %v180
    %v183 = vadd.f32 %v176, %v181
    %v184 = vmax.f32 %v183, 0.0
    %v185 = vld [vmem:[#allocation7] sm:$0xff]
    %v186 = vld [vmem:[#allocation7 + $0x8] sm:$0xff]
    %v187 = vld [vmem:[#allocation7 + $0x10] sm:$0xff]
    %v188 = vld [vmem:[#allocation7 + $0x18] sm:$0xff]
    %v189 = vld [vmem:[#allocation7 + $0x20] sm:$0xff]
    %v190 = vld [vmem:[#allocation7 + $0x28] sm:$0xff]
    %v191 = vld [vmem:[#allocation7 + $0x30] sm:$0xff]
    %v192 = vld [vmem:[#allocation7 + $0x38] sm:$0xff]
    %v193 = vld [vmem:[%s5] sm:$0x1]
    %v195 = vlaneseq
    %v196 = vshrl.u32 %v195, 7
    %v197 = vsub.s32 0, %v196
    %v198 = vrot.slane %v193, %v197
    %v201 = vsel %vm142, %v184, 0
    %203 = vmatprep.subr.mxu0 0.0
    %204 = vmatpush1.msra.mxu0 %v185
    %205 = vmatprep.subr.mxu0 0.0
    %206 = vmatpush1.msra.mxu0 %v186
    %207 = vmatprep.subr.mxu0 0.0
    %208 = vmatpush1.msra.mxu0 %v187
    %209 = vmatprep.subr.mxu0 0.0
    %210 = vmatpush1.msra.mxu0 %v188
    %211 = vmatprep.subr.mxu0 0.0
    %212 = vmatpush1.msra.mxu0 %v189
    %213 = vmatprep.subr.mxu0 0.0
    %214 = vmatpush1.msra.mxu0 %v190
    %215 = vmatprep.subr.mxu0 0.0
    %216 = vmatpush1.msra.mxu0 %v191
    %217 = vmatprep.subr.mxu0 0.0
    %218 = vmatpush1.msra.mxu0 %v192
    %219 = vmatprep.subr.mxu0 0.0
    %220 = vmatpush1.msra.mxu0 0.0
    %221 = vmatprep.subr.mxu0 0.0
    %222 = vmatpush1.msra.mxu0 0.0
    %223 = vmatprep.subr.mxu0 0.0
    %224 = vmatpush1.msra.mxu0 0.0
    %225 = vmatprep.subr.mxu0 0.0
    %226 = vmatpush1.msra.mxu0 0.0
    %227 = vmatprep.subr.mxu0 0.0
    %228 = vmatpush1.msra.mxu0 0.0
    %229 = vmatprep.subr.mxu0 0.0
    %230 = vmatpush1.msra.mxu0 0.0
    %231 = vmatprep.subr.mxu0 0.0
    %232 = vmatpush1.msra.mxu0 0.0
    %233 = vmatprep.subr.mxu0 0.0
    %234 = vmatpush1.msra.mxu0 0.0
    %235 = vmatprep.subr.mxu0 0.0
    %236 = vmatpush1.msra.mxu0 0.0
    %237 = vmatprep.subr.mxu0 0.0
    %238 = vmatpush1.msra.mxu0 0.0
    %239 = vmatprep.subr.mxu0 0.0
    %240 = vmatpush1.msra.mxu0 0.0
    %241 = vmatprep.subr.mxu0 0.0
    %242 = vmatpush1.msra.mxu0 0.0
    %243 = vmatprep.subr.mxu0 0.0
    %244 = vmatpush1.msra.mxu0 0.0
    %245 = vmatprep.subr.mxu0 0.0
    %246 = vmatpush1.msra.mxu0 0.0
    %247 = vmatprep.subr.mxu0 0.0
    %248 = vmatpush1.msra.mxu0 0.0
    %249 = vmatprep.subr.mxu0 0.0
    %250 = vmatpush1.msra.mxu0 0.0
    %251 = vmatprep.subr.mxu0 0.0
    %252 = vmatpush1.msra.mxu0 0.0
    %253 = vmatprep.subr.mxu0 0.0
    %254 = vmatpush1.msra.mxu0 0.0
    %255 = vmatprep.subr.mxu0 0.0
    %256 = vmatpush1.msra.mxu0 0.0
    %257 = vmatprep.subr.mxu0 0.0
    %258 = vmatpush1.msra.mxu0 0.0
    %259 = vmatprep.subr.mxu0 0.0
    %260 = vmatpush1.msra.mxu0 0.0
    %261 = vmatprep.subr.mxu0 0.0
    %262 = vmatpush1.msra.mxu0 0.0
    %263 = vmatprep.subr.mxu0 0.0
    %264 = vmatpush1.msra.mxu0 0.0
    %265 = vmatprep.subr.mxu0 0.0
    %266 = vmatpush1.msra.mxu0 0.0
    %267 = vmatprep.mubr.f32.mxu0 0.0
    %268 = vmatmul.mubr.f32.gmra.mrb[0].mxu0 %v201
    %v269 = vpop.f32.mrb[0].mxu0
    %v270 = vadd.f32 %v198, %v269
    %v271 = vpop.f32.mrb[0].mxu0
    %272 = vdwg.mxu0
    %273 = vst [vmem:[#allocation8] sm:$0xff] %v270
    // Predicated region
    $region38: #{tpu_custom_call.1} parent=1 // pred_check
      _
    $region39: #{tpu_custom_call.1} parent=1 // pred_check_branch
      %275 = sbr.rel (0) target = $region41
    $region40: #{tpu_custom_call.1} parent=1 // pred_region
      %s277 = ssub.s32 128, 128
      %278 = vsyncadd [#allocation4], %s277
      %s280 = sshll.u32 [#allocation8], 4
      %s281 = int_to_ptr.vmem [resolvable:$true] %s280
      %283 = dma.vmem_to_hbm [thread:$0]  %s281, 128, %s6, [#allocation4]
    $region41: #{tpu_custom_call.1} parent=1 // pred_fallthru
      _
    // Predicated region
    $region42: #{tpu_custom_call.1} parent=1 // pred_check
      _
    $region43: #{tpu_custom_call.1} parent=1 // pred_check_branch
      %285 = sbr.rel (0) target = $region45
    $region44: #{tpu_custom_call.1} parent=1 // pred_region
      %286 = dma.done [#allocation4], 128
    $region45: #{tpu_custom_call.1} parent=1 // pred_fallthru
      _
    %287 = vsyncpa [#allocation3], 1
    %288 = vsyncpa [#allocation6], 1
    %289 = vsyncpa [#allocation4], 1

</llo_original>
